<compile_context>
chip_gen: v5e
topology: v5e:2x2
jax: 0.10.0
libtpu: 0.0.40
codegen_flags: <defaults>
</compile_context>

<pallas_src>
import math

import numpy as np
import jax
import jax.numpy as jnp
from jax.experimental import pallas as pl
from jax.experimental.pallas import tpu as pltpu


# ----------------------------------------------------------------------------
# In-kernel math helpers
# ----------------------------------------------------------------------------
def _erf_approx(x):
    # Abramowitz & Stegun 7.1.26, max abs error ~1.5e-7.
    a1, a2, a3, a4, a5 = 0.254829592, -0.284496736, 1.421413741, -1.453152027, 1.061405429
    p = 0.3275911
    sgn = jnp.where(x >= 0.0, 1.0, -1.0)
    ax = jnp.abs(x)
    t = pl.reciprocal(1.0 + p * ax, approx=True)     # EUP slot
    poly = ((((a5 * t + a4) * t + a3) * t + a2) * t + a1) * t
    return sgn * (1.0 - poly * jnp.exp(-ax * ax))


def _gelu_exact(x):
    # Matches torch.nn.GELU() (erf-based) up to the approximation error above.
    return 0.5 * x * (1.0 + _erf_approx(x * 0.7071067811865476))


# ----------------------------------------------------------------------------
# Operator preparation (plain JAX / numpy glue — runs ONCE, not per forward)
# ----------------------------------------------------------------------------
def build_lpf_mask(H, W):
    m = np.zeros((H, W), np.float32)
    for xx in range(W):
        for yy in range(H):
            if (xx - (W - 1) / 2) ** 2 + (yy - (H - 1) / 2) ** 2 < 1:
                m[yy, xx] = 1.0
    return m


def build_filter_operator(H, W, mask):
    """Complex (P,P) operator equal to ifft2(roll(fft2(.)) * mask), flattened."""
    P = H * W
    eye = jnp.eye(P, dtype=jnp.float32).reshape(P, H, W)
    F = jnp.fft.fftn(eye, axes=(1, 2))
    F = jnp.roll(F, (H // 2, W // 2), axis=(1, 2))
    F = F * jnp.asarray(mask)[None]
    Y = jnp.fft.ifftn(F, axes=(1, 2)).reshape(P, P)   # Y[q, p] = filter(e_q)[p]
    M = Y.T                                           # y_flat = M @ x_flat
    return jnp.real(M).astype(jnp.float32), jnp.imag(M).astype(jnp.float32)


def init_params(key, input_dims, nums_head=12, reduction=2):
    C = input_dims
    Cmid = C // reduction
    k1, k2, k3, k4, k5 = jax.random.split(key, 5)
    return {
        "w1": jax.random.normal(k1, (Cmid, C, 1, 1), jnp.float32) / math.sqrt(C),
        "w2": jax.random.normal(k2, (C, Cmid, 3, 3), jnp.float32) / math.sqrt(Cmid * 9),
        "wq": jax.random.normal(k3, (C, C, 1, 1), jnp.float32) / math.sqrt(C),
        "wk": jax.random.normal(k4, (C, C, 1, 1), jnp.float32) / math.sqrt(C),
        "wv": jax.random.normal(k5, (C, C, 1, 1), jnp.float32) / math.sqrt(C),
        "nums_head": nums_head,
        "reduction": reduction,
        "mask": build_lpf_mask(4, 5),                 # hard-coded 4x5, as in the module
    }


def prepare_adapter(params, H, W):
    """One-time operator construction, hoisted out of the per-call forward."""
    C = int(params["w1"].shape[1])
    Cmid = int(params["w1"].shape[0])
    heads = int(params["nums_head"])
    P = H * W
    bf16 = jnp.bfloat16
    mask = params["mask"]
    assert mask.shape == (H, W), "module's hard-coded 4x5 mask implies H=4, W=5"

    # transposed / fused weights (bf16 operands, f32 MXU accumulation)
    w1t = jnp.asarray(params["w1"][:, :, 0, 0]).T.astype(bf16)                  # (C, Cmid)
    w2row = jnp.concatenate(
        [jnp.asarray(params["w2"][:, :, kh, kw]).T
         for kh in range(3) for kw in range(3)], axis=1).astype(bf16)           # (Cmid, 9C)
    wqkv = jnp.concatenate(
        [jnp.asarray(params[nm][:, :, 0, 0]).T for nm in ("wq", "wk", "wv")],
        axis=1)                                                                 # (C, 3C) f32
    Np = ((3 * C + 127) // 128) * 128       # pad N to full lane tiles -> unmasked stores
    wqkv_p = jnp.zeros((C, Np), jnp.float32).at[:, :3 * C].set(wqkv).astype(bf16)

    # 3x3 tap flat row offsets + pre-broadcast destination validity masks (9, P, C)
    offsets = tuple((kh - 1) * W + (kw - 1) for kh in range(3) for kw in range(3))
    tap = np.zeros((9, P), np.float32)
    for kh in range(3):
        for kw in range(3):
            o = kh * 3 + kw
            for hh in range(H):
                for ww in range(W):
                    if 0 <= hh + kh - 1 < H and 0 <= ww + kw - 1 < W:
                        tap[o, hh * W + ww] = 1.0
    tapmask = jnp.asarray(np.ascontiguousarray(
        np.broadcast_to(tap[:, :, None], (9, P, C))))                           # (9, P, C) f32

    # spectral filter: abs(ifft2(roll(fft2(.)) * mask)) as per-batch real/imag operators
    Mre, Mim = build_filter_operator(H, W, mask)                                # (P, P) each
    mspec = jnp.stack([Mre, Mim], axis=0).astype(bf16)                          # (2, P, P)

    return {"w1t": w1t, "w2row": w2row, "wqkv": wqkv_p, "tapmask": tapmask,
            "mspec": mspec, "offsets": offsets, "H": H, "W": W, "P": P,
            "C": C, "Cmid": Cmid, "Np": Np, "nums_head": heads}


# ----------------------------------------------------------------------------
# Forward: reshape activations + one pallas_call over a per-batch grid
# ----------------------------------------------------------------------------
def qkv_adapter_forward(x, h, prep):
    B, n, dims = x.shape
    H = h // 16
    W = (n - 1) // H
    P = n - 1
    C = dims
    heads = prep["nums_head"]
    Cmid = prep["Cmid"]
    Np = prep["Np"]
    offsets = prep["offsets"]
    assert (H, W, P, C) == (prep["H"], prep["W"], prep["P"], prep["C"])
    assert C % heads == 0
    bf16 = jnp.bfloat16

    # activations: (B, P, C) channels-last, CLS token dropped
    x2 = x[:, 1:, :].astype(bf16)

    def kernel(x_ref, w1_ref, w2_ref, tap_ref, m_ref, wqkv_ref, out_ref):
        # conv[0]: 1x1 conv C -> Cmid, exact (erf) GELU
        a1 = jnp.dot(x_ref[0], w1_ref[...], preferred_element_type=jnp.float32)
        t1 = _gelu_exact(a1).astype(jnp.bfloat16)                           # (P, Cmid)

        # conv[2]: 3x3 conv (pad=1) = one channel-mix matmul into 9*C lanes,
        # then 9 in-register shifted slices (+ zero fill) * 0/1 masks, summed.
        # No VMEM scratch round-trip: the slab stays in vregs.
        slab = jnp.dot(t1, w2_ref[...], preferred_element_type=jnp.float32)  # (P, 9C)
        acc = jnp.zeros((P, C), jnp.float32)
        for o, d in enumerate(offsets):                                      # static 9-tap unroll
            v = slab[:, o * C:(o + 1) * C]
            if d > 0:
                v = jnp.concatenate([v[d:, :], jnp.zeros((d, C), jnp.float32)], axis=0)
            elif d < 0:
                v = jnp.concatenate([jnp.zeros((-d, C), jnp.float32), v[:P + d, :]], axis=0)
            acc = acc + tap_ref[o] * v
        t2 = _gelu_exact(acc).astype(jnp.bfloat16)                           # (P, C)

        # filter: abs(ifft(roll(fft(.)) * mask)) via precomputed real/imag operators
        re = jnp.dot(m_ref[0], t2, preferred_element_type=jnp.float32)       # (P, C)
        im = jnp.dot(m_ref[1], t2, preferred_element_type=jnp.float32)
        filt = jnp.sqrt(re * re + im * im).astype(jnp.bfloat16)

        # fused q/k/v projection; lane-dense (Np multiple of 128) bf16 store
        out_ref[0] = jnp.dot(filt, wqkv_ref[...],
                             preferred_element_type=jnp.float32).astype(out_ref.dtype)

    # NOTE: all operands per grid step total ~100 KB, far below any VMEM limit.
    # For very large B, per-batch grid steps keep VMEM O(P^2) (no kron blow-up);
    # set pltpu.CompilerParams(vmem_limit_bytes=...) only if tile sizes grow.
    out = pl.pallas_call(
        kernel,
        out_shape=jax.ShapeDtypeStruct((B, P, Np), bf16),
        grid_spec=pltpu.PrefetchScalarGridSpec(
            num_scalar_prefetch=0,
            grid=(B,),
            in_specs=[
                pl.BlockSpec((1, P, C), lambda b: (b, 0, 0)),      # activations (per batch)
                pl.BlockSpec((C, Cmid), lambda b: (0, 0)),         # w1^T
                pl.BlockSpec((Cmid, 9 * C), lambda b: (0, 0)),     # w2 row-fused
                pl.BlockSpec((9, P, C), lambda b: (0, 0, 0)),      # pre-broadcast tap masks
                pl.BlockSpec((2, P, P), lambda b: (0, 0, 0)),      # spectral re/im operator
                pl.BlockSpec((C, Np), lambda b: (0, 0)),           # fused q/k/v (lane padded)
            ],
            out_specs=pl.BlockSpec((1, P, Np), lambda b: (b, 0, 0)),
        ),
        compiler_params=pltpu.CompilerParams(
            dimension_semantics=("parallel",)),                    # v7x: shard batches over TCs
    )(x2, prep["w1t"], prep["w2row"], prep["tapmask"], prep["mspec"], prep["wqkv"])

    out = out[:, :, :3 * C].astype(jnp.float32)                    # strip lane padding
    hd = C // heads

    def to_heads(t):  # (B, P, C) -> (B, heads, P, hd), same as the torch permutes
        return t.reshape(B, P, heads, hd).transpose(0, 2, 1, 3)

    return [to_heads(out[..., 0:C]),
            to_heads(out[..., C:2 * C]),
            to_heads(out[..., 2 * C:3 * C])]


# ----------------------------------------------------------------------------
# Pure-JAX reference (mirrors the PyTorch forward op-by-op).  It rounds the
# matmul/conv operands (and the final projection output) to bf16 at the same
# stage boundaries as the kernel, so the comparison isolates kernel bugs
# rather than the deliberate bf16-MXU precision choice.
# ----------------------------------------------------------------------------
def reference_forward(x, h, params):
    B, n, dims = x.shape
    H = h // 16
    W = (n - 1) // H
    C = dims
    heads = params["nums_head"]
    f32, bf16 = jnp.float32, jnp.bfloat16

    images = x[:, 1:, :].reshape(B, H, W, C).transpose(0, 3, 1, 2).astype(bf16)  # NCHW
    t1 = jax.nn.gelu(
        jnp.einsum("bchw,oc->bohw", images, params["w1"][:, :, 0, 0].astype(bf16),
                   preferred_element_type=f32),
        approximate=False)
    t2 = jax.lax.conv_general_dilated(
        t1.astype(bf16), params["w2"].astype(bf16), (1, 1), "SAME",
        dimension_numbers=("NCHW", "OIHW", "NCHW"), preferred_element_type=f32)
    t2 = jax.nn.gelu(t2, approximate=False)

    F = jnp.fft.fftn(t2.astype(bf16).astype(f32), axes=(2, 3))
    F = jnp.roll(F, (H // 2, W // 2), axis=(2, 3))
    F = F * jnp.asarray(params["mask"])[None, None]
    filt = jnp.abs(jnp.fft.ifftn(F, axes=(2, 3))).astype(bf16)

    def proj(w):
        y = jnp.einsum("bchw,oc->bohw", filt, w[:, :, 0, 0].astype(bf16),
                       preferred_element_type=f32)
        y = y.astype(bf16).astype(f32)               # match the kernel's bf16 output store
        y = y.reshape(B, C, -1).transpose(0, 2, 1)
        return y.reshape(B, n - 1, heads, C // heads).transpose(0, 2, 1, 3)

    return [proj(params["wq"]), proj(params["wk"]), proj(params["wv"])]


# ----------------------------------------------------------------------------
if __name__ == "__main__":
    # Shapes implied by the module: mask is 4x5 -> H=4, W=5 -> h=64, n=21.
    B = 2
    h = 64
    H, W = h // 16, 5
    n = H * W + 1              # 21
    input_dims = 32            # channels of the ViT tokens
    nums_head = 4              # head_dim = 8
    reduction = 2

    key = jax.random.PRNGKey(0)
    kx, kp = jax.random.split(key)
    x = jax.random.normal(kx, (B, n, input_dims), jnp.float32)
    params = init_params(kp, input_dims, nums_head=nums_head, reduction=reduction)

    # One-time operator construction (hoisted out of the forward).
    prep = prepare_adapter(params, H, W)

    q, k, v = qkv_adapter_forward(x, h, prep)
    jax.block_until_ready((q, k, v))

    # Tolerance: the kernel uses single-pass bf16 MXU operands (incl. the
    # bf16-rounded spectral operator), an approximate EUP reciprocal in the
    # erf, and a bf16 output store, while the reference keeps the FFT path in
    # f32 — expected mismatch is a few 1e-3; 1e-2 still catches any
    # structural/indexing error.
    q_ref, k_ref, v_ref = reference_forward(x, h, params)
    np.testing.assert_allclose(np.asarray(q), np.asarray(q_ref), rtol=1e-2, atol=1e-2)
    np.testing.assert_allclose(np.asarray(k), np.asarray(k_ref), rtol=1e-2, atol=1e-2)
    np.testing.assert_allclose(np.asarray(v), np.asarray(v_ref), rtol=1e-2, atol=1e-2)

    assert q.shape == (B, nums_head, n - 1, input_dims // nums_head)
    print("KERNEL_OK")
</pallas_src>

<mosaic_0001>
module attributes {stable_mosaic.version = 11 : i64} {
  func.func @kernel(%arg0: i32, %arg1: memref<1x20x32xbf16, #tpu.memory_space<vmem>>, %arg2: memref<32x16xbf16, #tpu.memory_space<vmem>>, %arg3: memref<16x288xbf16, #tpu.memory_space<vmem>>, %arg4: memref<9x20x32xf32, #tpu.memory_space<vmem>>, %arg5: memref<2x20x20xbf16, #tpu.memory_space<vmem>>, %arg6: memref<32x128xbf16, #tpu.memory_space<vmem>>, %arg7: memref<1x20x128xbf16, #tpu.memory_space<vmem>>) attributes {dimension_semantics = [#tpu.dimension_semantics<parallel>], iteration_bounds = array<i64: 2>, scalar_prefetch = 0 : i64, scratch_operands = 0 : i64, tpu.core_type = #tpu.core_type<tc>, window_params = [{transform_indices = @transform_0, window_bounds = array<i64: 1, 20, 32>}, {pipeline_mode = #tpu.pipeline_mode<synchronous>, transform_indices = @transform_1, window_bounds = array<i64: 32, 16>}, {pipeline_mode = #tpu.pipeline_mode<synchronous>, transform_indices = @transform_2, window_bounds = array<i64: 16, 288>}, {pipeline_mode = #tpu.pipeline_mode<synchronous>, transform_indices = @transform_3, window_bounds = array<i64: 9, 20, 32>}, {pipeline_mode = #tpu.pipeline_mode<synchronous>, transform_indices = @transform_4, window_bounds = array<i64: 2, 20, 20>}, {pipeline_mode = #tpu.pipeline_mode<synchronous>, transform_indices = @transform_5, window_bounds = array<i64: 32, 128>}, {transform_indices = @transform_6, window_bounds = array<i64: 1, 20, 128>}]} {
    %c0 = arith.constant 0 : index
    %c0_0 = arith.constant 0 : index
    %c0_1 = arith.constant 0 : index
    %0 = vector.load %arg1[%c0, %c0_0, %c0_1] : memref<1x20x32xbf16, #tpu.memory_space<vmem>>, vector<1x20x32xbf16>
    %1 = vector.shape_cast %0 : vector<1x20x32xbf16> to vector<20x32xbf16>
    %c0_2 = arith.constant 0 : index
    %c0_3 = arith.constant 0 : index
    %2 = vector.load %arg2[%c0_2, %c0_3] : memref<32x16xbf16, #tpu.memory_space<vmem>>, vector<32x16xbf16>
    %cst = arith.constant dense<0.000000e+00> : vector<20x16xf32>
    %3 = tpu.matmul %1, %2, %cst {dimension_numbers = #tpu.dot_dimension_numbers<[1], [0], [0], [1], [0, 0, 1, 1], [], []>} : vector<20x32xbf16>, vector<32x16xbf16>, vector<20x16xf32> -> vector<20x16xf32>
    %cst_4 = arith.constant 5.000000e-01 : f32
    %4 = vector.broadcast %cst_4 : f32 to vector<20x16xf32>
    %5 = arith.mulf %4, %3 : vector<20x16xf32>
    %cst_5 = arith.constant 0.707106769 : f32
    %6 = vector.broadcast %cst_5 : f32 to vector<20x16xf32>
    %7 = arith.mulf %3, %6 : vector<20x16xf32>
    %cst_6 = arith.constant 0.000000e+00 : f32
    %8 = vector.broadcast %cst_6 : f32 to vector<20x16xf32>
    %9 = arith.cmpf oge, %7, %8 : vector<20x16xf32>
    %cst_7 = arith.constant 1.000000e+00 : f32
    %cst_8 = arith.constant -1.000000e+00 : f32
    %10 = vector.broadcast %cst_7 : f32 to vector<20x16xf32>
    %11 = vector.broadcast %cst_8 : f32 to vector<20x16xf32>
    %12 = arith.select %9, %10, %11 : vector<20x16xi1>, vector<20x16xf32>
    %13 = math.absf %7 : vector<20x16xf32>
    %cst_9 = arith.constant 0.327591091 : f32
    %14 = vector.broadcast %cst_9 : f32 to vector<20x16xf32>
    %15 = arith.mulf %14, %13 : vector<20x16xf32>
    %cst_10 = arith.constant 1.000000e+00 : f32
    %16 = vector.broadcast %cst_10 : f32 to vector<20x16xf32>
    %17 = arith.addf %16, %15 : vector<20x16xf32>
    %18 = tpu.reciprocal %17 {approx = true} : vector<20x16xf32> -> vector<20x16xf32>
    %cst_11 = arith.constant 1.06140542 : f32
    %19 = vector.broadcast %cst_11 : f32 to vector<20x16xf32>
    %20 = arith.mulf %19, %18 : vector<20x16xf32>
    %cst_12 = arith.constant -1.45315206 : f32
    %21 = vector.broadcast %cst_12 : f32 to vector<20x16xf32>
    %22 = arith.addf %20, %21 : vector<20x16xf32>
    %23 = arith.mulf %22, %18 : vector<20x16xf32>
    %cst_13 = arith.constant 1.42141378 : f32
    %24 = vector.broadcast %cst_13 : f32 to vector<20x16xf32>
    %25 = arith.addf %23, %24 : vector<20x16xf32>
    %26 = arith.mulf %25, %18 : vector<20x16xf32>
    %cst_14 = arith.constant -0.284496725 : f32
    %27 = vector.broadcast %cst_14 : f32 to vector<20x16xf32>
    %28 = arith.addf %26, %27 : vector<20x16xf32>
    %29 = arith.mulf %28, %18 : vector<20x16xf32>
    %cst_15 = arith.constant 0.254829586 : f32
    %30 = vector.broadcast %cst_15 : f32 to vector<20x16xf32>
    %31 = arith.addf %29, %30 : vector<20x16xf32>
    %32 = arith.mulf %31, %18 : vector<20x16xf32>
    %cst_16 = arith.constant 0.000000e+00 : f32
    %33 = vector.broadcast %cst_16 : f32 to vector<20x16xf32>
    %34 = arith.subf %33, %13 : vector<20x16xf32>
    %35 = arith.mulf %34, %13 : vector<20x16xf32>
    %36 = math.exp %35 : vector<20x16xf32>
    %37 = arith.mulf %32, %36 : vector<20x16xf32>
    %cst_17 = arith.constant 1.000000e+00 : f32
    %38 = vector.broadcast %cst_17 : f32 to vector<20x16xf32>
    %39 = arith.subf %38, %37 : vector<20x16xf32>
    %40 = arith.mulf %12, %39 : vector<20x16xf32>
    %cst_18 = arith.constant 1.000000e+00 : f32
    %41 = vector.broadcast %cst_18 : f32 to vector<20x16xf32>
    %42 = arith.addf %41, %40 : vector<20x16xf32>
    %43 = arith.mulf %5, %42 : vector<20x16xf32>
    %44 = arith.truncf %43 : vector<20x16xf32> to vector<20x16xbf16>
    %c0_19 = arith.constant 0 : index
    %c0_20 = arith.constant 0 : index
    %45 = vector.load %arg3[%c0_19, %c0_20] : memref<16x288xbf16, #tpu.memory_space<vmem>>, vector<16x288xbf16>
    %cst_21 = arith.constant dense<0.000000e+00> : vector<20x288xf32>
    %46 = tpu.matmul %44, %45, %cst_21 {dimension_numbers = #tpu.dot_dimension_numbers<[1], [0], [0], [1], [0, 0, 1, 1], [], []>} : vector<20x16xbf16>, vector<16x288xbf16>, vector<20x288xf32> -> vector<20x288xf32>
    %cst_22 = arith.constant 0.000000e+00 : f32
    %47 = vector.broadcast %cst_22 : f32 to vector<20x32xf32>
    %48 = vector.extract_strided_slice %46 {offsets = [0, 0], sizes = [20, 32], strides = [1, 1]} : vector<20x288xf32> to vector<20x32xf32>
    %cst_23 = arith.constant 0.000000e+00 : f32
    %49 = vector.broadcast %cst_23 : f32 to vector<6x32xf32>
    %50 = vector.extract_strided_slice %48 {offsets = [0, 0], sizes = [14, 32], strides = [1, 1]} : vector<20x32xf32> to vector<14x32xf32>
    %51 = tpu.concatenate %49, %50 in 0 : vector<6x32xf32>, vector<14x32xf32> -> vector<20x32xf32>
    %c0_24 = arith.constant 0 : index
    %c0_25 = arith.constant 0 : index
    %c0_26 = arith.constant 0 : index
    %52 = vector.load %arg4[%c0_24, %c0_25, %c0_26] : memref<9x20x32xf32, #tpu.memory_space<vmem>>, vector<1x20x32xf32>
    %53 = vector.shape_cast %52 : vector<1x20x32xf32> to vector<20x32xf32>
    %54 = arith.mulf %53, %51 : vector<20x32xf32>
    %55 = arith.addf %47, %54 : vector<20x32xf32>
    %56 = vector.extract_strided_slice %46 {offsets = [0, 32], sizes = [20, 32], strides = [1, 1]} : vector<20x288xf32> to vector<20x32xf32>
    %cst_27 = arith.constant 0.000000e+00 : f32
    %57 = vector.broadcast %cst_27 : f32 to vector<5x32xf32>
    %58 = vector.extract_strided_slice %56 {offsets = [0, 0], sizes = [15, 32], strides = [1, 1]} : vector<20x32xf32> to vector<15x32xf32>
    %59 = tpu.concatenate %57, %58 in 0 : vector<5x32xf32>, vector<15x32xf32> -> vector<20x32xf32>
    %c1 = arith.constant 1 : index
    %c0_28 = arith.constant 0 : index
    %c0_29 = arith.constant 0 : index
    %60 = vector.load %arg4[%c1, %c0_28, %c0_29] : memref<9x20x32xf32, #tpu.memory_space<vmem>>, vector<1x20x32xf32>
    %61 = vector.shape_cast %60 : vector<1x20x32xf32> to vector<20x32xf32>
    %62 = arith.mulf %61, %59 : vector<20x32xf32>
    %63 = arith.addf %55, %62 : vector<20x32xf32>
    %64 = vector.extract_strided_slice %46 {offsets = [0, 64], sizes = [20, 32], strides = [1, 1]} : vector<20x288xf32> to vector<20x32xf32>
    %cst_30 = arith.constant 0.000000e+00 : f32
    %65 = vector.broadcast %cst_30 : f32 to vector<4x32xf32>
    %66 = vector.extract_strided_slice %64 {offsets = [0, 0], sizes = [16, 32], strides = [1, 1]} : vector<20x32xf32> to vector<16x32xf32>
    %67 = tpu.concatenate %65, %66 in 0 : vector<4x32xf32>, vector<16x32xf32> -> vector<20x32xf32>
    %c2 = arith.constant 2 : index
    %c0_31 = arith.constant 0 : index
    %c0_32 = arith.constant 0 : index
    %68 = vector.load %arg4[%c2, %c0_31, %c0_32] : memref<9x20x32xf32, #tpu.memory_space<vmem>>, vector<1x20x32xf32>
    %69 = vector.shape_cast %68 : vector<1x20x32xf32> to vector<20x32xf32>
    %70 = arith.mulf %69, %67 : vector<20x32xf32>
    %71 = arith.addf %63, %70 : vector<20x32xf32>
    %72 = vector.extract_strided_slice %46 {offsets = [0, 96], sizes = [20, 32], strides = [1, 1]} : vector<20x288xf32> to vector<20x32xf32>
    %cst_33 = arith.constant 0.000000e+00 : f32
    %73 = vector.broadcast %cst_33 : f32 to vector<1x32xf32>
    %74 = vector.extract_strided_slice %72 {offsets = [0, 0], sizes = [19, 32], strides = [1, 1]} : vector<20x32xf32> to vector<19x32xf32>
    %75 = tpu.concatenate %73, %74 in 0 : vector<1x32xf32>, vector<19x32xf32> -> vector<20x32xf32>
    %c3 = arith.constant 3 : index
    %c0_34 = arith.constant 0 : index
    %c0_35 = arith.constant 0 : index
    %76 = vector.load %arg4[%c3, %c0_34, %c0_35] : memref<9x20x32xf32, #tpu.memory_space<vmem>>, vector<1x20x32xf32>
    %77 = vector.shape_cast %76 : vector<1x20x32xf32> to vector<20x32xf32>
    %78 = arith.mulf %77, %75 : vector<20x32xf32>
    %79 = arith.addf %71, %78 : vector<20x32xf32>
    %80 = vector.extract_strided_slice %46 {offsets = [0, 128], sizes = [20, 32], strides = [1, 1]} : vector<20x288xf32> to vector<20x32xf32>
    %c4 = arith.constant 4 : index
    %c0_36 = arith.constant 0 : index
    %c0_37 = arith.constant 0 : index
    %81 = vector.load %arg4[%c4, %c0_36, %c0_37] : memref<9x20x32xf32, #tpu.memory_space<vmem>>, vector<1x20x32xf32>
    %82 = vector.shape_cast %81 : vector<1x20x32xf32> to vector<20x32xf32>
    %83 = arith.mulf %82, %80 : vector<20x32xf32>
    %84 = arith.addf %79, %83 : vector<20x32xf32>
    %85 = vector.extract_strided_slice %46 {offsets = [0, 160], sizes = [20, 32], strides = [1, 1]} : vector<20x288xf32> to vector<20x32xf32>
    %86 = vector.extract_strided_slice %85 {offsets = [1, 0], sizes = [19, 32], strides = [1, 1]} : vector<20x32xf32> to vector<19x32xf32>
    %cst_38 = arith.constant 0.000000e+00 : f32
    %87 = vector.broadcast %cst_38 : f32 to vector<1x32xf32>
    %88 = tpu.concatenate %86, %87 in 0 : vector<19x32xf32>, vector<1x32xf32> -> vector<20x32xf32>
    %c5 = arith.constant 5 : index
    %c0_39 = arith.constant 0 : index
    %c0_40 = arith.constant 0 : index
    %89 = vector.load %arg4[%c5, %c0_39, %c0_40] : memref<9x20x32xf32, #tpu.memory_space<vmem>>, vector<1x20x32xf32>
    %90 = vector.shape_cast %89 : vector<1x20x32xf32> to vector<20x32xf32>
    %91 = arith.mulf %90, %88 : vector<20x32xf32>
    %92 = arith.addf %84, %91 : vector<20x32xf32>
    %93 = vector.extract_strided_slice %46 {offsets = [0, 192], sizes = [20, 32], strides = [1, 1]} : vector<20x288xf32> to vector<20x32xf32>
    %94 = vector.extract_strided_slice %93 {offsets = [4, 0], sizes = [16, 32], strides = [1, 1]} : vector<20x32xf32> to vector<16x32xf32>
    %cst_41 = arith.constant 0.000000e+00 : f32
    %95 = vector.broadcast %cst_41 : f32 to vector<4x32xf32>
    %96 = tpu.concatenate %94, %95 in 0 : vector<16x32xf32>, vector<4x32xf32> -> vector<20x32xf32>
    %c6 = arith.constant 6 : index
    %c0_42 = arith.constant 0 : index
    %c0_43 = arith.constant 0 : index
    %97 = vector.load %arg4[%c6, %c0_42, %c0_43] : memref<9x20x32xf32, #tpu.memory_space<vmem>>, vector<1x20x32xf32>
    %98 = vector.shape_cast %97 : vector<1x20x32xf32> to vector<20x32xf32>
    %99 = arith.mulf %98, %96 : vector<20x32xf32>
    %100 = arith.addf %92, %99 : vector<20x32xf32>
    %101 = vector.extract_strided_slice %46 {offsets = [0, 224], sizes = [20, 32], strides = [1, 1]} : vector<20x288xf32> to vector<20x32xf32>
    %102 = vector.extract_strided_slice %101 {offsets = [5, 0], sizes = [15, 32], strides = [1, 1]} : vector<20x32xf32> to vector<15x32xf32>
    %cst_44 = arith.constant 0.000000e+00 : f32
    %103 = vector.broadcast %cst_44 : f32 to vector<5x32xf32>
    %104 = tpu.concatenate %102, %103 in 0 : vector<15x32xf32>, vector<5x32xf32> -> vector<20x32xf32>
    %c7 = arith.constant 7 : index
    %c0_45 = arith.constant 0 : index
    %c0_46 = arith.constant 0 : index
    %105 = vector.load %arg4[%c7, %c0_45, %c0_46] : memref<9x20x32xf32, #tpu.memory_space<vmem>>, vector<1x20x32xf32>
    %106 = vector.shape_cast %105 : vector<1x20x32xf32> to vector<20x32xf32>
    %107 = arith.mulf %106, %104 : vector<20x32xf32>
    %108 = arith.addf %100, %107 : vector<20x32xf32>
    %109 = vector.extract_strided_slice %46 {offsets = [0, 256], sizes = [20, 32], strides = [1, 1]} : vector<20x288xf32> to vector<20x32xf32>
    %110 = vector.extract_strided_slice %109 {offsets = [6, 0], sizes = [14, 32], strides = [1, 1]} : vector<20x32xf32> to vector<14x32xf32>
    %cst_47 = arith.constant 0.000000e+00 : f32
    %111 = vector.broadcast %cst_47 : f32 to vector<6x32xf32>
    %112 = tpu.concatenate %110, %111 in 0 : vector<14x32xf32>, vector<6x32xf32> -> vector<20x32xf32>
    %c8 = arith.constant 8 : index
    %c0_48 = arith.constant 0 : index
    %c0_49 = arith.constant 0 : index
    %113 = vector.load %arg4[%c8, %c0_48, %c0_49] : memref<9x20x32xf32, #tpu.memory_space<vmem>>, vector<1x20x32xf32>
    %114 = vector.shape_cast %113 : vector<1x20x32xf32> to vector<20x32xf32>
    %115 = arith.mulf %114, %112 : vector<20x32xf32>
    %116 = arith.addf %108, %115 : vector<20x32xf32>
    %cst_50 = arith.constant 5.000000e-01 : f32
    %117 = vector.broadcast %cst_50 : f32 to vector<20x32xf32>
    %118 = arith.mulf %117, %116 : vector<20x32xf32>
    %cst_51 = arith.constant 0.707106769 : f32
    %119 = vector.broadcast %cst_51 : f32 to vector<20x32xf32>
    %120 = arith.mulf %116, %119 : vector<20x32xf32>
    %cst_52 = arith.constant 0.000000e+00 : f32
    %121 = vector.broadcast %cst_52 : f32 to vector<20x32xf32>
    %122 = arith.cmpf oge, %120, %121 : vector<20x32xf32>
    %cst_53 = arith.constant 1.000000e+00 : f32
    %cst_54 = arith.constant -1.000000e+00 : f32
    %123 = vector.broadcast %cst_53 : f32 to vector<20x32xf32>
    %124 = vector.broadcast %cst_54 : f32 to vector<20x32xf32>
    %125 = arith.select %122, %123, %124 : vector<20x32xi1>, vector<20x32xf32>
    %126 = math.absf %120 : vector<20x32xf32>
    %cst_55 = arith.constant 0.327591091 : f32
    %127 = vector.broadcast %cst_55 : f32 to vector<20x32xf32>
    %128 = arith.mulf %127, %126 : vector<20x32xf32>
    %cst_56 = arith.constant 1.000000e+00 : f32
    %129 = vector.broadcast %cst_56 : f32 to vector<20x32xf32>
    %130 = arith.addf %129, %128 : vector<20x32xf32>
    %131 = tpu.reciprocal %130 {approx = true} : vector<20x32xf32> -> vector<20x32xf32>
    %cst_57 = arith.constant 1.06140542 : f32
    %132 = vector.broadcast %cst_57 : f32 to vector<20x32xf32>
    %133 = arith.mulf %132, %131 : vector<20x32xf32>
    %cst_58 = arith.constant -1.45315206 : f32
    %134 = vector.broadcast %cst_58 : f32 to vector<20x32xf32>
    %135 = arith.addf %133, %134 : vector<20x32xf32>
    %136 = arith.mulf %135, %131 : vector<20x32xf32>
    %cst_59 = arith.constant 1.42141378 : f32
    %137 = vector.broadcast %cst_59 : f32 to vector<20x32xf32>
    %138 = arith.addf %136, %137 : vector<20x32xf32>
    %139 = arith.mulf %138, %131 : vector<20x32xf32>
    %cst_60 = arith.constant -0.284496725 : f32
    %140 = vector.broadcast %cst_60 : f32 to vector<20x32xf32>
    %141 = arith.addf %139, %140 : vector<20x32xf32>
    %142 = arith.mulf %141, %131 : vector<20x32xf32>
    %cst_61 = arith.constant 0.254829586 : f32
    %143 = vector.broadcast %cst_61 : f32 to vector<20x32xf32>
    %144 = arith.addf %142, %143 : vector<20x32xf32>
    %145 = arith.mulf %144, %131 : vector<20x32xf32>
    %cst_62 = arith.constant 0.000000e+00 : f32
    %146 = vector.broadcast %cst_62 : f32 to vector<20x32xf32>
    %147 = arith.subf %146, %126 : vector<20x32xf32>
    %148 = arith.mulf %147, %126 : vector<20x32xf32>
    %149 = math.exp %148 : vector<20x32xf32>
    %150 = arith.mulf %145, %149 : vector<20x32xf32>
    %cst_63 = arith.constant 1.000000e+00 : f32
    %151 = vector.broadcast %cst_63 : f32 to vector<20x32xf32>
    %152 = arith.subf %151, %150 : vector<20x32xf32>
    %153 = arith.mulf %125, %152 : vector<20x32xf32>
    %cst_64 = arith.constant 1.000000e+00 : f32
    %154 = vector.broadcast %cst_64 : f32 to vector<20x32xf32>
    %155 = arith.addf %154, %153 : vector<20x32xf32>
    %156 = arith.mulf %118, %155 : vector<20x32xf32>
    %157 = arith.truncf %156 : vector<20x32xf32> to vector<20x32xbf16>
    %c0_65 = arith.constant 0 : index
    %c0_66 = arith.constant 0 : index
    %c0_67 = arith.constant 0 : index
    %158 = vector.load %arg5[%c0_65, %c0_66, %c0_67] : memref<2x20x20xbf16, #tpu.memory_space<vmem>>, vector<1x20x20xbf16>
    %159 = vector.shape_cast %158 : vector<1x20x20xbf16> to vector<20x20xbf16>
    %cst_68 = arith.constant dense<0.000000e+00> : vector<20x32xf32>
    %160 = tpu.matmul %159, %157, %cst_68 {dimension_numbers = #tpu.dot_dimension_numbers<[1], [0], [0], [1], [0, 0, 1, 1], [], []>} : vector<20x20xbf16>, vector<20x32xbf16>, vector<20x32xf32> -> vector<20x32xf32>
    %c1_69 = arith.constant 1 : index
    %c0_70 = arith.constant 0 : index
    %c0_71 = arith.constant 0 : index
    %161 = vector.load %arg5[%c1_69, %c0_70, %c0_71] : memref<2x20x20xbf16, #tpu.memory_space<vmem>>, vector<1x20x20xbf16>
    %162 = vector.shape_cast %161 : vector<1x20x20xbf16> to vector<20x20xbf16>
    %cst_72 = arith.constant dense<0.000000e+00> : vector<20x32xf32>
    %163 = tpu.matmul %162, %157, %cst_72 {dimension_numbers = #tpu.dot_dimension_numbers<[1], [0], [0], [1], [0, 0, 1, 1], [], []>} : vector<20x20xbf16>, vector<20x32xbf16>, vector<20x32xf32> -> vector<20x32xf32>
    %164 = arith.mulf %160, %160 : vector<20x32xf32>
    %165 = arith.mulf %163, %163 : vector<20x32xf32>
    %166 = arith.addf %164, %165 : vector<20x32xf32>
    %167 = math.sqrt %166 : vector<20x32xf32>
    %168 = arith.truncf %167 : vector<20x32xf32> to vector<20x32xbf16>
    %c0_73 = arith.constant 0 : index
    %c0_74 = arith.constant 0 : index
    %169 = vector.load %arg6[%c0_73, %c0_74] : memref<32x128xbf16, #tpu.memory_space<vmem>>, vector<32x128xbf16>
    %cst_75 = arith.constant dense<0.000000e+00> : vector<20x128xf32>
    %170 = tpu.matmul %168, %169, %cst_75 {dimension_numbers = #tpu.dot_dimension_numbers<[1], [0], [0], [1], [0, 0, 1, 1], [], []>} : vector<20x32xbf16>, vector<32x128xbf16>, vector<20x128xf32> -> vector<20x128xf32>
    %171 = arith.truncf %170 : vector<20x128xf32> to vector<20x128xbf16>
    %c0_76 = arith.constant 0 : index
    %c0_77 = arith.constant 0 : index
    %c0_78 = arith.constant 0 : index
    %172 = vector.load %arg7[%c0_76, %c0_77, %c0_78] : memref<1x20x128xbf16, #tpu.memory_space<vmem>>, vector<1x20x128xbf16>
    %173 = vector.shape_cast %172 : vector<1x20x128xbf16> to vector<20x128xbf16>
    %174 = vector.shape_cast %171 : vector<20x128xbf16> to vector<1x20x128xbf16>
    tpu.vector_store %arg7[%c0_76, %c0_77, %c0_78], %174 {strides = array<i32>} : memref<1x20x128xbf16, #tpu.memory_space<vmem>>, vector<1x20x128xbf16>,
    return
  }
  func.func @transform_0(%arg0: i32) -> (i32, i32, i32) {
    %c0_i32 = arith.constant 0 : i32
    %c0_i32_0 = arith.constant 0 : i32
    %c0_i32_1 = arith.constant 0 : i32
    return %arg0, %c0_i32, %c0_i32_0 : i32, i32, i32
  }
  func.func @transform_1(%arg0: i32) -> (i32, i32) {
    %c0_i32 = arith.constant 0 : i32
    %c0_i32_0 = arith.constant 0 : i32
    %c0_i32_1 = arith.constant 0 : i32
    return %c0_i32, %c0_i32_0 : i32, i32
  }
  func.func @transform_2(%arg0: i32) -> (i32, i32) {
    %c0_i32 = arith.constant 0 : i32
    %c0_i32_0 = arith.constant 0 : i32
    %c0_i32_1 = arith.constant 0 : i32
    return %c0_i32, %c0_i32_0 : i32, i32
  }
  func.func @transform_3(%arg0: i32) -> (i32, i32, i32) {
    %c0_i32 = arith.constant 0 : i32
    %c0_i32_0 = arith.constant 0 : i32
    %c0_i32_1 = arith.constant 0 : i32
    %c0_i32_2 = arith.constant 0 : i32
    return %c0_i32, %c0_i32_0, %c0_i32_1 : i32, i32, i32
  }
  func.func @transform_4(%arg0: i32) -> (i32, i32, i32) {
    %c0_i32 = arith.constant 0 : i32
    %c0_i32_0 = arith.constant 0 : i32
    %c0_i32_1 = arith.constant 0 : i32
    %c0_i32_2 = arith.constant 0 : i32
    return %c0_i32, %c0_i32_0, %c0_i32_1 : i32, i32, i32
  }
  func.func @transform_5(%arg0: i32) -> (i32, i32) {
    %c0_i32 = arith.constant 0 : i32
    %c0_i32_0 = arith.constant 0 : i32
    %c0_i32_1 = arith.constant 0 : i32
    return %c0_i32, %c0_i32_0 : i32, i32
  }
  func.func @transform_6(%arg0: i32) -> (i32, i32, i32) {
    %c0_i32 = arith.constant 0 : i32
    %c0_i32_0 = arith.constant 0 : i32
    %c0_i32_1 = arith.constant 0 : i32
    return %arg0, %c0_i32, %c0_i32_0 : i32, i32, i32
  }
}

</mosaic_0001>

<llo_original>
// kernel: tpu_custom_call.1
$region0: #{tpu_custom_call.1}
  #allocation0 [shape = 'u32[]', space=smem, size = 0x4, offset = 0x4, fixed_abs, tag = 'smem constant byte address 0x4 - core index']
  #allocation1 [shape = 'u32[72,128]{1,0:T(1,128)}', space=vmem, size = 0x9000, scoped, tag = 'internal scratch']
  %s0 = inlined_call_operand.vmem [shape: bf16[2,20,32], index: 0, kind: input, shape index: {}]
  %s1 = inlined_call_operand.vmem [shape: bf16[32,16], index: 1, kind: input, shape index: {}]
  %s2 = inlined_call_operand.vmem [shape: bf16[16,288], index: 2, kind: input, shape index: {}]
  %s3 = inlined_call_operand.hbm [shape: f32[9,20,32], index: 3, kind: input, shape index: {}]
  %s4 = inlined_call_operand.vmem [shape: bf16[2,20,20], index: 4, kind: input, shape index: {}]
  %s5 = inlined_call_operand.vmem [shape: bf16[32,128], index: 5, kind: input, shape index: {}]
  %s6 = inlined_call_operand.vmem [shape: bf16[2,20,128], index: 6, kind: output, shape index: {}]
  %s7 = sld [smem:[#allocation0]]
  $region61: #{tpu_custom_call.1} parent=0
    _
  %s9 = ssub.s32 1, %s7
  %s10 = scalar_select 0, %s9, %s7
  $region1: #{tpu_custom_call.1} parent=0
    #allocation2 [shape = 'u8[110592]{0}', space=vmem, size = 0x1b000, scoped, tag = 'input window, operand 3, single buffered']
    #allocation3 [shape = 's32[2]{0}', space=sflag, size = 0x8, scoped, tag = 'scoped memory for tpu_custom_call.1']
    %11 = vsyncpa [#allocation3], 0
    loop: start=0, step=1, limit=4
    $region2: #{tpu_custom_call.1} parent=1 // loop_pre_header
      _
    $region3: #{tpu_custom_call.1} parent=1 // loop_header
      %s13 = sphi 0, %s17
      %p14 = scmp.ge.s32.totalorder %s13, 4
      %s23 = sphi 0, %s25
      %s26 = sphi 0, %s23
      %s27 = sphi 0, %s26
      %s43 = sphi 0, %s27
      %s47 = sphi 0, %s47
      %s49 = sphi 0, %s47
      %s50 = sphi 0, %s49
      %s64 = sphi 0, %s50
      %s68 = sphi 0, %s68
      %s70 = sphi 0, %s68
      %s71 = sphi 0, %s70
      %s85 = sphi 0, %s71
      %s89 = sphi 0, %s89
      %s91 = sphi 0, %s89
      %s92 = sphi 0, %s91
      %s106 = sphi 0, %s92
      %s110 = sphi 0, %s110
      %s112 = sphi 0, %s110
      %s113 = sphi 0, %s112
      %s127 = sphi 0, %s113
      %s131 = sphi 0, %s131
      %s133 = sphi 0, %s131
      %s134 = sphi 0, %s133
      %s148 = sphi 0, %s134
      %s154 = sphi 0, %s156
      %s157 = sphi 0, %s154
      %s158 = sphi 0, %s157
      %s174 = sphi 0, %s158
    $region4: #{tpu_custom_call.1} parent=1 // loop_header_branch
      %16 = sbr.rel (%p14) target = $region8
    $region5: #{tpu_custom_call.1} parent=1 // loop_body
      %s18 = ssub.s32 %s13, 1
      %s19 = ssub.s32 %s13, 2
      %s20 = sadd.s32 %s13, 1
      %s21 = ssub.s32 %s13, %s20
      %p22 = scmp.eq.s32.totalorder %s21, 0
      %s24 = sadd.s32 %s23, 1
      %s25 = scalar_select %p22, %s23, %s24
      %p28 = pneg %p22
      %p29 = scmp.eq.s32.totalorder %s13, 1
      %p30 = por %p28, %p29
      %p31 = scmp.ne.s32.totalorder %s23, %s26
      %p32 = scmp.eq.s32.totalorder %s13, 0
      %p33 = por %p31, %p32
      %p34 = scmp.ne.s32.totalorder %s23, %s26
      %p35 = scmp.eq.s32.totalorder %s18, 1
      %p36 = por %p34, %p35
      %p37 = scmp.ne.s32.totalorder %s26, %s27
      %p38 = scmp.eq.s32.totalorder %s18, 0
      %p39 = por %p37, %p38
      %p40 = scmp.ne.s32.totalorder %s26, %s27
      %p41 = scmp.eq.s32.totalorder %s19, 1
      %p42 = por %p40, %p41
      %p44 = scmp.ne.s32.totalorder %s27, %s43
      %p45 = scmp.eq.s32.totalorder %s19, 0
      %p46 = por %p44, %p45
      %s48 = sadd.s32 %s47, 1
      %p51 = scmp.eq.s32.totalorder %s13, 1
      %p52 = scmp.ne.s32.totalorder %s47, %s49
      %p53 = scmp.eq.s32.totalorder %s13, 0
      %p54 = por %p52, %p53
      %p55 = scmp.ne.s32.totalorder %s47, %s49
      %p56 = scmp.eq.s32.totalorder %s18, 1
      %p57 = por %p55, %p56
      %p58 = scmp.ne.s32.totalorder %s49, %s50
      %p59 = scmp.eq.s32.totalorder %s18, 0
      %p60 = por %p58, %p59
      %p61 = scmp.ne.s32.totalorder %s49, %s50
      %p62 = scmp.eq.s32.totalorder %s19, 1
      %p63 = por %p61, %p62
      %p65 = scmp.ne.s32.totalorder %s50, %s64
      %p66 = scmp.eq.s32.totalorder %s19, 0
      %p67 = por %p65, %p66
      %s69 = sadd.s32 %s68, 1
      %p72 = scmp.eq.s32.totalorder %s13, 1
      %p73 = scmp.ne.s32.totalorder %s68, %s70
      %p74 = scmp.eq.s32.totalorder %s13, 0
      %p75 = por %p73, %p74
      %p76 = scmp.ne.s32.totalorder %s68, %s70
      %p77 = scmp.eq.s32.totalorder %s18, 1
      %p78 = por %p76, %p77
      %p79 = scmp.ne.s32.totalorder %s70, %s71
      %p80 = scmp.eq.s32.totalorder %s18, 0
      %p81 = por %p79, %p80
      %p82 = scmp.ne.s32.totalorder %s70, %s71
      %p83 = scmp.eq.s32.totalorder %s19, 1
      %p84 = por %p82, %p83
      %p86 = scmp.ne.s32.totalorder %s71, %s85
      %p87 = scmp.eq.s32.totalorder %s19, 0
      %p88 = por %p86, %p87
      %s90 = sadd.s32 %s89, 1
      %p93 = scmp.eq.s32.totalorder %s13, 1
      %p94 = scmp.ne.s32.totalorder %s89, %s91
      %p95 = scmp.eq.s32.totalorder %s13, 0
      %p96 = por %p94, %p95
      %p97 = scmp.ne.s32.totalorder %s89, %s91
      %p98 = scmp.eq.s32.totalorder %s18, 1
      %p99 = por %p97, %p98
      %p100 = scmp.ne.s32.totalorder %s91, %s92
      %p101 = scmp.eq.s32.totalorder %s18, 0
      %p102 = por %p100, %p101
      %p103 = scmp.ne.s32.totalorder %s91, %s92
      %p104 = scmp.eq.s32.totalorder %s19, 1
      %p105 = por %p103, %p104
      %p107 = scmp.ne.s32.totalorder %s92, %s106
      %p108 = scmp.eq.s32.totalorder %s19, 0
      %p109 = por %p107, %p108
      %s111 = sadd.s32 %s110, 1
      %p114 = scmp.eq.s32.totalorder %s13, 1
      %p115 = scmp.ne.s32.totalorder %s110, %s112
      %p116 = scmp.eq.s32.totalorder %s13, 0
      %p117 = por %p115, %p116
      %p118 = scmp.ne.s32.totalorder %s110, %s112
      %p119 = scmp.eq.s32.totalorder %s18, 1
      %p120 = por %p118, %p119
      %p121 = scmp.ne.s32.totalorder %s112, %s113
      %p122 = scmp.eq.s32.totalorder %s18, 0
      %p123 = por %p121, %p122
      %p124 = scmp.ne.s32.totalorder %s112, %s113
      %p125 = scmp.eq.s32.totalorder %s19, 1
      %p126 = por %p124, %p125
      %p128 = scmp.ne.s32.totalorder %s113, %s127
      %p129 = scmp.eq.s32.totalorder %s19, 0
      %p130 = por %p128, %p129
      %s132 = sadd.s32 %s131, 1
      %p135 = scmp.eq.s32.totalorder %s13, 1
      %p136 = scmp.ne.s32.totalorder %s131, %s133
      %p137 = scmp.eq.s32.totalorder %s13, 0
      %p138 = por %p136, %p137
      %p139 = scmp.ne.s32.totalorder %s131, %s133
      %p140 = scmp.eq.s32.totalorder %s18, 1
      %p141 = por %p139, %p140
      %p142 = scmp.ne.s32.totalorder %s133, %s134
      %p143 = scmp.eq.s32.totalorder %s18, 0
      %p144 = por %p142, %p143
      %p145 = scmp.ne.s32.totalorder %s133, %s134
      %p146 = scmp.eq.s32.totalorder %s19, 1
      %p147 = por %p145, %p146
      %p149 = scmp.ne.s32.totalorder %s134, %s148
      %p150 = scmp.eq.s32.totalorder %s19, 0
      %p151 = por %p149, %p150
      %s152 = ssub.s32 %s13, %s20
      %p153 = scmp.eq.s32.totalorder %s152, 0
      %s155 = sadd.s32 %s154, 1
      %s156 = scalar_select %p153, %s154, %s155
      %p159 = pneg %p153
      %p160 = scmp.eq.s32.totalorder %s13, 1
      %p161 = por %p159, %p160
      %p162 = scmp.ne.s32.totalorder %s154, %s157
      %p163 = scmp.eq.s32.totalorder %s13, 0
      %p164 = por %p162, %p163
      %p165 = scmp.ne.s32.totalorder %s154, %s157
      %p166 = scmp.eq.s32.totalorder %s18, 1
      %p167 = por %p165, %p166
      %p168 = scmp.ne.s32.totalorder %s157, %s158
      %p169 = scmp.eq.s32.totalorder %s18, 0
      %p170 = por %p168, %p169
      %p171 = scmp.ne.s32.totalorder %s157, %s158
      %p172 = scmp.eq.s32.totalorder %s19, 1
      %p173 = por %p171, %p172
      %p175 = scmp.ne.s32.totalorder %s158, %s174
      %p176 = scmp.eq.s32.totalorder %s19, 0
      %p177 = por %p175, %p176
      %p178 = scmp.le.s32.totalorder 1, %s13
      %p179 = scmp.lt.s32.totalorder %s13, 3
      %p180 = pnand %p178, %p179
      %p181 = pneg %p180
      // Predicated region
      $region9: #{tpu_custom_call.1} parent=5 // pred_check
        _
      $region10: #{tpu_custom_call.1} parent=5 // pred_check_branch
        %183 = sbr.rel (%p180) target = $region12
      $region11: #{tpu_custom_call.1} parent=5 // pred_region
        %s184 = ssub.s32 %s13, 1
        // Predicated region
        $region13: #{tpu_custom_call.1} parent=11 // pred_check
          %p185 = pneg %p60
        $region14: #{tpu_custom_call.1} parent=11 // pred_check_branch
          %187 = sbr.rel (%p185) target = $region16
        $region15: #{tpu_custom_call.1} parent=11 // pred_region
          _
        $region16: #{tpu_custom_call.1} parent=11 // pred_fallthru
          _
        // Predicated region
        $region17: #{tpu_custom_call.1} parent=11 // pred_check
          %p188 = pneg %p81
        $region18: #{tpu_custom_call.1} parent=11 // pred_check_branch
          %190 = sbr.rel (%p188) target = $region20
        $region19: #{tpu_custom_call.1} parent=11 // pred_region
          _
        $region20: #{tpu_custom_call.1} parent=11 // pred_fallthru
          _
        // Predicated region
        $region21: #{tpu_custom_call.1} parent=11 // pred_check
          %p191 = pneg %p102
        $region22: #{tpu_custom_call.1} parent=11 // pred_check_branch
          %193 = sbr.rel (%p191) target = $region24
        $region23: #{tpu_custom_call.1} parent=11 // pred_region
          %195 = vsyncadd [#allocation3], 0
          %s196 = sshll.u32 %s3, 4
          %s197 = int_to_ptr.hbm [resolvable:$true] %s196
          %s198 = sshll.u32 [#allocation2], 4
          %s199 = int_to_ptr.vmem [resolvable:$true] %s198
          %204 = dma.hbm_to_vmem [thread:$0]  %s197, 3456, %s199, [#allocation3], 128, 128, 8
        $region24: #{tpu_custom_call.1} parent=11 // pred_fallthru
          _
        // Predicated region
        $region25: #{tpu_custom_call.1} parent=11 // pred_check
          %p205 = pneg %p123
        $region26: #{tpu_custom_call.1} parent=11 // pred_check_branch
          %207 = sbr.rel (%p205) target = $region28
        $region27: #{tpu_custom_call.1} parent=11 // pred_region
          _
        $region28: #{tpu_custom_call.1} parent=11 // pred_fallthru
          _
        // Predicated region
        $region29: #{tpu_custom_call.1} parent=11 // pred_check
          %p208 = pneg %p144
        $region30: #{tpu_custom_call.1} parent=11 // pred_check_branch
          %210 = sbr.rel (%p208) target = $region32
        $region31: #{tpu_custom_call.1} parent=11 // pred_region
          _
        $region32: #{tpu_custom_call.1} parent=11 // pred_fallthru
          _
      $region12: #{tpu_custom_call.1} parent=5 // pred_fallthru
        _
      %p211 = scmp.lt.s32.totalorder %s13, 2
      // Predicated region
      $region33: #{tpu_custom_call.1} parent=5 // pred_check
        %p212 = pneg %p211
      $region34: #{tpu_custom_call.1} parent=5 // pred_check_branch
        %214 = sbr.rel (%p212) target = $region36
      $region35: #{tpu_custom_call.1} parent=5 // pred_region
        // Predicated region
        $region37: #{tpu_custom_call.1} parent=35 // pred_check
          %p215 = pneg %p33
        $region38: #{tpu_custom_call.1} parent=35 // pred_check_branch
          %217 = sbr.rel (%p215) target = $region40
        $region39: #{tpu_custom_call.1} parent=35 // pred_region
          %p218 = scmp.lt.s32.totalorder %s13, 1
          %s219 = scalar_select %p218, %s13, 1
          %s220 = smul.addr %s219, 3
          %s221 = smul.addr %s220, 4
          %s222 = scalar_lea.vmem %s0, %s221
        $region40: #{tpu_custom_call.1} parent=35 // pred_fallthru
          _
      $region36: #{tpu_custom_call.1} parent=5 // pred_fallthru
        _
      %p223 = scmp.le.s32.totalorder 1, %s13
      %p224 = scmp.lt.s32.totalorder %s13, 3
      %p225 = pnand %p223, %p224
      %p226 = pneg %p225
      // Predicated region
      $region41: #{tpu_custom_call.1} parent=5 // pred_check
        _
      $region42: #{tpu_custom_call.1} parent=5 // pred_check_branch
        %228 = sbr.rel (%p225) target = $region44
      $region43: #{tpu_custom_call.1} parent=5 // pred_region
        %s229 = ssub.s32 %s13, 1
        // Predicated region
        $region45: #{tpu_custom_call.1} parent=43 // pred_check
          %p230 = pneg %p102
        $region46: #{tpu_custom_call.1} parent=43 // pred_check_branch
          %232 = sbr.rel (%p230) target = $region48
        $region47: #{tpu_custom_call.1} parent=43 // pred_region
          %234 = dma.done [#allocation3], 3456
        $region48: #{tpu_custom_call.1} parent=43 // pred_fallthru
          _
        %p235 = scmp.lt.s32.totalorder %s18, 1
        %s236 = scalar_select %p235, %s18, 1
        %s237 = smul.addr %s236, 3
        %s238 = smul.addr %s237, 4
        %s239 = scalar_lea.vmem %s0, %s238
        %p240 = pneg %p39
        %p241 = pneg %p36
        %p242 = pneg %p60
        %p243 = pneg %p57
        %p244 = pneg %p81
        %p245 = pneg %p78
        %p246 = pneg %p102
        %p247 = pneg %p99
        %p248 = pneg %p123
        %p249 = pneg %p120
        %p250 = pneg %p144
        %p251 = pneg %p141
        %p252 = pneg %p170
        %p253 = pneg %p167
        %p254 = scmp.lt.s32.totalorder %s18, 1
        %s255 = scalar_select %p254, %s18, 1
        %s256 = smul.addr %s255, 3
        %s257 = smul.addr %s256, 4
        %s258 = scalar_lea.vmem %s6, %s257
        %p259 = scmp.lt.s32.totalorder %s18, 1
        %s260 = scalar_select %p259, %s18, 1
        %s261 = smul.addr %s260, 3
        %s262 = smul.addr %s261, 4
        %s263 = scalar_lea.vmem %s0, %s262
        %p264 = scmp.lt.s32.totalorder %s18, 1
        %s265 = scalar_select %p264, %s18, 1
        %s266 = smul.addr %s265, 3
        %s267 = smul.addr %s266, 4
        %s268 = scalar_lea.vmem %s6, %s267
        %v270 = vld [vmem:[%s263] sm:$0xf]
        %v271 = vld [vmem:[%s263 + $0x4] sm:$0xf]
        %v272 = vld [vmem:[%s263 + $0x8] sm:$0x3]
        %v273 = vld [vmem:[%s1] sm:$0xf]
        %v274 = vld [vmem:[%s1 + $0x4] sm:$0xf]
        %v275 = vld [vmem:[%s1 + $0x8] sm:$0xf]
        %v276 = vld [vmem:[%s1 + $0xc] sm:$0xf]
        %v280 = vunpack.c.l.b16 %v270
        %v281 = vunpack.c.l.b16 %v271
        %v282 = vunpack.c.l.b16 %v272
        %v283 = vpack.c.b16 %v281, %v280
        %v284 = vpack.c.b16 %v282, %v282
        %v289 = vunpack.c.l.b16 %v273
        %v290 = vunpack.c.l.b16 %v274
        %v291 = vunpack.c.l.b16 %v275
        %v292 = vunpack.c.l.b16 %v276
        %v293 = vpack.c.b16 %v290, %v289
        %v294 = vpack.c.b16 %v292, %v291
        %vm297 = vcmask 261120
        %v299 = vsel %vm297, %v283, 0
        %v302 = vsel %vm297, %v284, 0
        %304 = vmatpush.bf16.msra.mxu0 0
        %305 = vmatpush.bf16.msra.mxu0 0
        %306 = vmatpush.bf16.msra.mxu0 0
        %307 = vmatpush.bf16.msra.mxu0 0
        %308 = vmatpush.bf16.msra.mxu0 0
        %309 = vmatpush.bf16.msra.mxu0 0
        %310 = vmatpush.bf16.msra.mxu0 %v294
        %311 = vmatpush.bf16.msra.mxu0 %v293
        %312 = vmatmul.bf16.gmra.mxu0 %v299
        %v313 = vpop.f32.mrf.mxu0
        %v314 = vadd.f32 0.0, %v313
        %v315 = vpop.f32.mrf.mxu0
        %v316 = vadd.f32 0.0, %v315
        %317 = vmatmul.bf16.gmra.mxu0 %v302
        %v318 = vpop.f32.mrf.mxu0
        %v319 = vadd.f32 0.0, %v318
        %v320 = vpop.f32.mrf.mxu0
        %321 = vdwg.mxu0
        %v322 = vmul.f32 %v314, 0.5
        %v323 = vmul.f32 %v316, 0.5
        %v324 = vmul.f32 %v319, 0.5
        %v325 = vmul.f32 %v314, 0.70710677
        %v326 = vmul.f32 %v316, 0.70710677
        %v327 = vmul.f32 %v319, 0.70710677
        %vm328 = vcmp.ge.f32.partialorder %v325, 0.0
        %vm329 = vcmp.ge.f32.partialorder %v326, 0.0
        %vm330 = vcmp.ge.f32.partialorder %v327, 0.0
        %v331 = vsel %vm328, 1.0, -1.0
        %v332 = vsel %vm329, 1.0, -1.0
        %v333 = vsel %vm330, 1.0, -1.0
        %v334 = vand.u32 2147483647, %v325
        %v335 = vand.u32 2147483647, %v326
        %v336 = vand.u32 2147483647, %v327
        %v337 = vmul.f32 %v334, 0.3275911
        %v338 = vmul.f32 %v335, 0.3275911
        %v339 = vmul.f32 %v336, 0.3275911
        %v340 = vadd.f32 %v337, 1.0
        %v341 = vadd.f32 %v338, 1.0
        %v342 = vadd.f32 %v339, 1.0
        %v343 = vrcp.pop %v340
        %v344 = vrcp.pop %v341
        %v345 = vrcp.pop %v342
        %v346 = vmul.f32 %v343, 1.0614054
        %v347 = vmul.f32 %v344, 1.0614054
        %v348 = vmul.f32 %v345, 1.0614054
        %v349 = vadd.f32 %v346, -1.4531521
        %v350 = vadd.f32 %v347, -1.4531521
        %v351 = vadd.f32 %v348, -1.4531521
        %v352 = vmul.f32 %v349, %v343
        %v353 = vmul.f32 %v350, %v344
        %v354 = vmul.f32 %v351, %v345
        %v355 = vadd.f32 %v352, 1.4214138
        %v356 = vadd.f32 %v353, 1.4214138
        %v357 = vadd.f32 %v354, 1.4214138
        %v358 = vmul.f32 %v355, %v343
        %v359 = vmul.f32 %v356, %v344
        %v360 = vmul.f32 %v357, %v345
        %v361 = vadd.f32 %v358, -0.28449672
        %v362 = vadd.f32 %v359, -0.28449672
        %v363 = vadd.f32 %v360, -0.28449672
        %v364 = vmul.f32 %v361, %v343
        %v365 = vmul.f32 %v362, %v344
        %v366 = vmul.f32 %v363, %v345
        %v367 = vadd.f32 %v364, 0.2548296
        %v368 = vadd.f32 %v365, 0.2548296
        %v369 = vadd.f32 %v366, 0.2548296
        %v370 = vmul.f32 %v367, %v343
        %v371 = vmul.f32 %v368, %v344
        %v372 = vmul.f32 %v369, %v345
        %v373 = vsub.f32 0.0, %v334
        %v374 = vsub.f32 0.0, %v335
        %v375 = vsub.f32 0.0, %v336
        %v376 = vmul.f32 %v373, %v334
        %v377 = vmul.f32 %v374, %v335
        %v378 = vmul.f32 %v375, %v336
        %v379 = vmul.f32 %v376, 1.442695
        %v380 = vpow.pop %v379
        %v381 = vmul.f32 %v377, 1.442695
        %v382 = vpow.pop %v381
        %v383 = vmul.f32 %v378, 1.442695
        %v384 = vpow.pop %v383
        %v385 = vmul.f32 %v370, %v380
        %v386 = vmul.f32 %v371, %v382
        %v387 = vmul.f32 %v372, %v384
        %v388 = vsub.f32 1.0, %v385
        %v389 = vsub.f32 1.0, %v386
        %v390 = vsub.f32 1.0, %v387
        %v391 = vmul.f32 %v331, %v388
        %v392 = vmul.f32 %v332, %v389
        %v393 = vmul.f32 %v333, %v390
        %v394 = vadd.f32 %v391, 1.0
        %v395 = vadd.f32 %v392, 1.0
        %v396 = vadd.f32 %v393, 1.0
        %v397 = vmul.f32 %v322, %v394
        %v398 = vmul.f32 %v323, %v395
        %v399 = vmul.f32 %v324, %v396
        %v400 = vpack.c.bf16 %v398, %v397
        %v401 = vpack.c.bf16 %v399, %v399
        %v402 = vld [vmem:[%s2] sm:$0xff]
        %v403 = vld [vmem:[%s2 + $0x8] sm:$0xf]
        %v404 = vld [vmem:[%s2 + $0xc] sm:$0xff]
        %v405 = vld [vmem:[%s2 + $0x14] sm:$0xf]
        %v410 = vunpack.c.l.b16 %v402
        %v411 = vunpack.c.h.b16 %v402
        %v412 = vunpack.c.l.b16 %v403
        %v413 = vunpack.c.l.b16 %v404
        %v414 = vunpack.c.h.b16 %v404
        %v415 = vunpack.c.l.b16 %v405
        %v416 = vpack.c.b16 %v413, %v410
        %v417 = vpack.c.b16 %v414, %v411
        %v418 = vpack.c.b16 %v415, %v412
        %vm422 = vcmask 130048
        %v424 = vsel %vm422, %v400, 0
        %v427 = vsel %vm422, %v401, 0
        %429 = vmatpush.bf16.msra.mxu0 0
        %430 = vmatpush.bf16.msra.mxu0 0
        %431 = vmatpush.bf16.msra.mxu0 0
        %432 = vmatpush.bf16.msra.mxu0 0
        %433 = vmatpush.bf16.msra.mxu0 0
        %434 = vmatpush.bf16.msra.mxu0 0
        %435 = vmatpush.bf16.msra.mxu0 0
        %436 = vmatpush.bf16.msra.mxu0 %v416
        %437 = vmatmul.bf16.gmra.mxu0 %v424
        %v438 = vpop.f32.mrf.mxu0
        %v439 = vadd.f32 0.0, %v438
        %v440 = vpop.f32.mrf.mxu0
        %v441 = vadd.f32 0.0, %v440
        %442 = vmatmul.bf16.gmra.mxu0 %v427
        %v443 = vpop.f32.mrf.mxu0
        %v444 = vadd.f32 0.0, %v443
        %v445 = vpop.f32.mrf.mxu0
        %446 = vdwg.mxu0
        %447 = vmatpush.bf16.msra.mxu0 0
        %448 = vmatpush.bf16.msra.mxu0 0
        %449 = vmatpush.bf16.msra.mxu0 0
        %450 = vmatpush.bf16.msra.mxu0 0
        %451 = vmatpush.bf16.msra.mxu0 0
        %452 = vmatpush.bf16.msra.mxu0 0
        %453 = vmatpush.bf16.msra.mxu0 0
        %454 = vmatpush.bf16.msra.mxu0 %v417
        %455 = vmatmul.bf16.gmra.mxu0 %v424
        %v456 = vpop.f32.mrf.mxu0
        %v457 = vadd.f32 0.0, %v456
        %v458 = vpop.f32.mrf.mxu0
        %v459 = vadd.f32 0.0, %v458
        %460 = vmatmul.bf16.gmra.mxu0 %v427
        %v461 = vpop.f32.mrf.mxu0
        %v462 = vadd.f32 0.0, %v461
        %v463 = vpop.f32.mrf.mxu0
        %464 = vdwg.mxu0
        %465 = vmatpush.bf16.msra.mxu0 0
        %466 = vmatpush.bf16.msra.mxu0 0
        %467 = vmatpush.bf16.msra.mxu0 0
        %468 = vmatpush.bf16.msra.mxu0 0
        %469 = vmatpush.bf16.msra.mxu0 0
        %470 = vmatpush.bf16.msra.mxu0 0
        %471 = vmatpush.bf16.msra.mxu0 0
        %472 = vmatpush.bf16.msra.mxu0 %v418
        %473 = vmatmul.bf16.gmra.mxu0 %v424
        %v474 = vpop.f32.mrf.mxu0
        %v475 = vadd.f32 0.0, %v474
        %v476 = vpop.f32.mrf.mxu0
        %v477 = vadd.f32 0.0, %v476
        %478 = vmatmul.bf16.gmra.mxu0 %v427
        %v479 = vpop.f32.mrf.mxu0
        %v480 = vadd.f32 0.0, %v479
        %v481 = vpop.f32.mrf.mxu0
        %482 = vdwg.mxu0
        %vm485 = vcmask 1045504
        %v486 = vrot.slane %v439, 2
        %v487 = vrot.slane %v441, 2
        %v488 = vsel %vm485, %v486, %v487
        %v492 = vsel %vm485, 0.0, %v486
        %v493 = vld [vmem:[#allocation2] sm:$0xff]
        %v494 = vld [vmem:[#allocation2 + $0x8] sm:$0xff]
        %v495 = vld [vmem:[#allocation2 + $0x10] sm:$0xf]
        %v496 = vmul.f32 %v493, %v492
        %v497 = vmul.f32 %v494, %v488
        %v498 = vmul.f32 %v495, %v487
        %v499 = vadd.f32 %v496, 0.0
        %v500 = vadd.f32 %v497, 0.0
        %v501 = vadd.f32 %v498, 0.0
        %vm502 = vcmask 1044480
        %v503 = vrot.slane %v439, 3
        %v504 = vrot.slane %v441, 3
        %v505 = vsel %vm502, %v503, %v504
        %506 = vrot.lane.b32.xlu0 %v503, 96
        %v507 = vpop.permute.xlu0 %506
        %508 = vrot.lane.b32.xlu0 %v505, 96
        %v509 = vpop.permute.xlu0 %508
        %510 = vrot.lane.b32.xlu0 %v504, 96
        %v511 = vpop.permute.xlu0 %510
        %v515 = vsel %vm502, 0.0, %v507
        %s516 = scalar_lea.vmem [#allocation2], 24
        %v517 = vld [vmem:[%s516] sm:$0xff]
        %v518 = vld [vmem:[%s516 + $0x8] sm:$0xff]
        %v519 = vld [vmem:[%s516 + $0x10] sm:$0xf]
        %v520 = vmul.f32 %v517, %v515
        %v521 = vmul.f32 %v518, %v509
        %v522 = vmul.f32 %v519, %v511
        %v523 = vadd.f32 %v499, %v520
        %v524 = vadd.f32 %v500, %v521
        %v525 = vadd.f32 %v501, %v522
        %vm526 = vcmask 1043456
        %v527 = vrot.slane %v439, 4
        %v528 = vrot.slane %v441, 4
        %v529 = vsel %vm526, %v527, %v528
        %530 = vrot.lane.b32.xlu0 %v527, 64
        %v531 = vpop.permute.xlu0 %530
        %532 = vrot.lane.b32.xlu0 %v529, 64
        %v533 = vpop.permute.xlu0 %532
        %534 = vrot.lane.b32.xlu0 %v528, 64
        %v535 = vpop.permute.xlu0 %534
        %v539 = vsel %vm526, 0.0, %v531
        %s540 = scalar_lea.vmem [#allocation2], 48
        %v541 = vld [vmem:[%s540] sm:$0xff]
        %v542 = vld [vmem:[%s540 + $0x8] sm:$0xff]
        %v543 = vld [vmem:[%s540 + $0x10] sm:$0xf]
        %v544 = vmul.f32 %v541, %v539
        %v545 = vmul.f32 %v542, %v533
        %v546 = vmul.f32 %v543, %v535
        %v547 = vadd.f32 %v523, %v544
        %v548 = vadd.f32 %v524, %v545
        %v549 = vadd.f32 %v525, %v546
        %vm551 = vcmask 1040384
        %v552 = vrot.slane %v439, 7
        %v553 = vrot.slane %v441, 7
        %v554 = vsel %vm551, %v552, %v553
        %v555 = vrot.slane %v444, 7
        %v556 = vsel %vm551, %v553, %v555
        %557 = vrot.lane.b32.xlu0 %v552, 32
        %v558 = vpop.permute.xlu0 %557
        %559 = vrot.lane.b32.xlu0 %v554, 32
        %v560 = vpop.permute.xlu0 %559
        %561 = vrot.lane.b32.xlu0 %v556, 32
        %v562 = vpop.permute.xlu0 %561
        %v566 = vsel %vm551, 0.0, %v558
        %s567 = scalar_lea.vmem [#allocation2], 72
        %v568 = vld [vmem:[%s567] sm:$0xff]
        %v569 = vld [vmem:[%s567 + $0x8] sm:$0xff]
        %v570 = vld [vmem:[%s567 + $0x10] sm:$0xf]
        %v571 = vmul.f32 %v568, %v566
        %v572 = vmul.f32 %v569, %v560
        %v573 = vmul.f32 %v570, %v562
        %v574 = vadd.f32 %v547, %v571
        %v575 = vadd.f32 %v548, %v572
        %v576 = vadd.f32 %v549, %v573
        %s577 = scalar_lea.vmem [#allocation2], 96
        %v578 = vld [vmem:[%s577] sm:$0xff]
        %v579 = vld [vmem:[%s577 + $0x8] sm:$0xff]
        %v580 = vld [vmem:[%s577 + $0x10] sm:$0xf]
        %v581 = vmul.f32 %v578, %v457
        %v582 = vmul.f32 %v579, %v459
        %v583 = vmul.f32 %v580, %v462
        %v584 = vadd.f32 %v574, %v581
        %v585 = vadd.f32 %v575, %v582
        %v586 = vadd.f32 %v576, %v583
        %vm590 = vcmask 1046528
        %v591 = vrot.slane %v457, 1
        %v592 = vrot.slane %v459, 1
        %v593 = vsel %vm590, %v591, %v592
        %v594 = vrot.slane %v462, 1
        %v595 = vsel %vm590, %v592, %v594
        %vm597 = vcmask 1042432
        %v598 = vsel %vm597, %v594, 0.0
        %s599 = scalar_lea.vmem [#allocation2], 120
        %v600 = vld [vmem:[%s599] sm:$0xff]
        %v601 = vld [vmem:[%s599 + $0x8] sm:$0xff]
        %v602 = vld [vmem:[%s599 + $0x10] sm:$0xf]
        %604 = vrot.lane.b32.xlu0 %v593, 96
        %v605 = vpop.permute.xlu0 %604
        %606 = vrot.lane.b32.xlu0 %v595, 96
        %v607 = vpop.permute.xlu0 %606
        %608 = vrot.lane.b32.xlu0 %v598, 96
        %v609 = vpop.permute.xlu0 %608
        %v613 = vmul.f32 %v600, %v605
        %v614 = vmul.f32 %v601, %v607
        %v615 = vmul.f32 %v602, %v609
        %v616 = vadd.f32 %v584, %v613
        %v617 = vadd.f32 %v585, %v614
        %v618 = vadd.f32 %v586, %v615
        %v619 = vrot.slane %v457, 4
        %v620 = vrot.slane %v459, 4
        %v621 = vsel %vm526, %v619, %v620
        %v622 = vrot.slane %v462, 4
        %v623 = vsel %vm526, %v620, %v622
        %s624 = scalar_lea.vmem [#allocation2], 144
        %v625 = vld [vmem:[%s624] sm:$0xff]
        %v626 = vld [vmem:[%s624 + $0x8] sm:$0xff]
        %v627 = vld [vmem:[%s624 + $0x10] sm:$0xf]
        %629 = vrot.lane.b32.xlu0 %v621, 64
        %v630 = vpop.permute.xlu0 %629
        %631 = vrot.lane.b32.xlu0 %v623, 64
        %v632 = vpop.permute.xlu0 %631
        %633 = vrot.lane.b32.xlu0 0.0, 64
        %v634 = vpop.permute.xlu0 %633
        %v638 = vmul.f32 %v625, %v630
        %v639 = vmul.f32 %v626, %v632
        %v640 = vmul.f32 %v627, %v634
        %v641 = vadd.f32 %v616, %v638
        %v642 = vadd.f32 %v617, %v639
        %v643 = vadd.f32 %v618, %v640
        %v644 = vrot.slane %v457, 5
        %v645 = vrot.slane %v459, 5
        %v646 = vsel %vm597, %v644, %v645
        %v647 = vrot.slane %v462, 5
        %v648 = vsel %vm597, %v645, %v647
        %v650 = vsel %vm590, %v648, 0.0
        %s651 = scalar_lea.vmem [#allocation2], 168
        %v652 = vld [vmem:[%s651] sm:$0xff]
        %v653 = vld [vmem:[%s651 + $0x8] sm:$0xff]
        %v654 = vld [vmem:[%s651 + $0x10] sm:$0xf]
        %656 = vrot.lane.b32.xlu0 %v646, 32
        %v657 = vpop.permute.xlu0 %656
        %658 = vrot.lane.b32.xlu0 %v650, 32
        %v659 = vpop.permute.xlu0 %658
        %660 = vrot.lane.b32.xlu0 0.0, 32
        %v661 = vpop.permute.xlu0 %660
        %v665 = vmul.f32 %v652, %v657
        %v666 = vmul.f32 %v653, %v659
        %v667 = vmul.f32 %v654, %v661
        %v668 = vadd.f32 %v641, %v665
        %v669 = vadd.f32 %v642, %v666
        %v670 = vadd.f32 %v643, %v667
        %vm674 = vcmask 1041408
        %v675 = vrot.slane %v475, 6
        %v676 = vrot.slane %v477, 6
        %v677 = vsel %vm674, %v675, %v676
        %v678 = vrot.slane %v480, 6
        %v679 = vsel %vm674, %v676, %v678
        %v682 = vsel %vm485, %v679, 0.0
        %s683 = scalar_lea.vmem [#allocation2], 192
        %v684 = vld [vmem:[%s683] sm:$0xff]
        %v685 = vld [vmem:[%s683 + $0x8] sm:$0xff]
        %v686 = vld [vmem:[%s683 + $0x10] sm:$0xf]
        %v687 = vmul.f32 %v684, %v677
        %v688 = vmul.f32 %v685, %v682
        %v689 = vmul.f32 %v686, 0.0
        %v690 = vadd.f32 %v668, %v687
        %v691 = vadd.f32 %v669, %v688
        %v692 = vadd.f32 %v670, %v689
        %v693 = vmul.f32 %v690, 0.5
        %v694 = vmul.f32 %v691, 0.5
        %v695 = vmul.f32 %v692, 0.5
        %v696 = vmul.f32 %v690, 0.70710677
        %v697 = vmul.f32 %v691, 0.70710677
        %v698 = vmul.f32 %v692, 0.70710677
        %vm699 = vcmp.ge.f32.partialorder %v696, 0.0
        %vm700 = vcmp.ge.f32.partialorder %v697, 0.0
        %vm701 = vcmp.ge.f32.partialorder %v698, 0.0
        %v702 = vsel %vm699, 1.0, -1.0
        %v703 = vsel %vm700, 1.0, -1.0
        %v704 = vsel %vm701, 1.0, -1.0
        %v705 = vand.u32 2147483647, %v696
        %v706 = vand.u32 2147483647, %v697
        %v707 = vand.u32 2147483647, %v698
        %v708 = vmul.f32 %v705, 0.3275911
        %v709 = vmul.f32 %v706, 0.3275911
        %v710 = vmul.f32 %v707, 0.3275911
        %v711 = vadd.f32 %v708, 1.0
        %v712 = vadd.f32 %v709, 1.0
        %v713 = vadd.f32 %v710, 1.0
        %v714 = vrcp.pop %v711
        %v715 = vrcp.pop %v712
        %v716 = vrcp.pop %v713
        %v717 = vmul.f32 %v714, 1.0614054
        %v718 = vmul.f32 %v715, 1.0614054
        %v719 = vmul.f32 %v716, 1.0614054
        %v720 = vadd.f32 %v717, -1.4531521
        %v721 = vadd.f32 %v718, -1.4531521
        %v722 = vadd.f32 %v719, -1.4531521
        %v723 = vmul.f32 %v720, %v714
        %v724 = vmul.f32 %v721, %v715
        %v725 = vmul.f32 %v722, %v716
        %v726 = vadd.f32 %v723, 1.4214138
        %v727 = vadd.f32 %v724, 1.4214138
        %v728 = vadd.f32 %v725, 1.4214138
        %v729 = vmul.f32 %v726, %v714
        %v730 = vmul.f32 %v727, %v715
        %v731 = vmul.f32 %v728, %v716
        %v732 = vadd.f32 %v729, -0.28449672
        %v733 = vadd.f32 %v730, -0.28449672
        %v734 = vadd.f32 %v731, -0.28449672
        %v735 = vmul.f32 %v732, %v714
        %v736 = vmul.f32 %v733, %v715
        %v737 = vmul.f32 %v734, %v716
        %v738 = vadd.f32 %v735, 0.2548296
        %v739 = vadd.f32 %v736, 0.2548296
        %v740 = vadd.f32 %v737, 0.2548296
        %v741 = vmul.f32 %v738, %v714
        %v742 = vmul.f32 %v739, %v715
        %v743 = vmul.f32 %v740, %v716
        %v744 = vsub.f32 0.0, %v705
        %v745 = vsub.f32 0.0, %v706
        %v746 = vsub.f32 0.0, %v707
        %v747 = vmul.f32 %v744, %v705
        %v748 = vmul.f32 %v745, %v706
        %v749 = vmul.f32 %v746, %v707
        %v750 = vmul.f32 %v747, 1.442695
        %v751 = vpow.pop %v750
        %v752 = vmul.f32 %v748, 1.442695
        %v753 = vpow.pop %v752
        %v754 = vmul.f32 %v749, 1.442695
        %v755 = vpow.pop %v754
        %v756 = vmul.f32 %v741, %v751
        %v757 = vmul.f32 %v742, %v753
        %v758 = vmul.f32 %v743, %v755
        %v759 = vsub.f32 1.0, %v756
        %v760 = vsub.f32 1.0, %v757
        %v761 = vsub.f32 1.0, %v758
        %v762 = vmul.f32 %v702, %v759
        %v763 = vmul.f32 %v703, %v760
        %v764 = vmul.f32 %v704, %v761
        %v765 = vadd.f32 %v762, 1.0
        %v766 = vadd.f32 %v763, 1.0
        %v767 = vadd.f32 %v764, 1.0
        %v768 = vmul.f32 %v693, %v765
        %v769 = vmul.f32 %v694, %v766
        %v770 = vmul.f32 %v695, %v767
        %v771 = vpack.c.bf16 %v769, %v768
        %v772 = vpack.c.bf16 %v770, %v770
        %v773 = vld [vmem:[%s4] sm:$0xf]
        %v774 = vld [vmem:[%s4 + $0x4] sm:$0xf]
        %v775 = vld [vmem:[%s4 + $0x8] sm:$0x3]
        %v779 = vunpack.c.l.b16 %v773
        %v780 = vunpack.c.l.b16 %v774
        %v781 = vunpack.c.l.b16 %v775
        %v782 = vpack.c.b16 %v780, %v779
        %v783 = vpack.c.b16 %v781, %v781
        %vm784 = vcmask 162816
        %v786 = vsel %vm784, %v782, 0
        %v789 = vsel %vm784, %v783, 0
        %v792 = vsel %vm674, %v772, 0
        %794 = vmatpush.bf16.msra.mxu0 0
        %795 = vmatpush.bf16.msra.mxu0 0
        %796 = vmatpush.bf16.msra.mxu0 0
        %797 = vmatpush.bf16.msra.mxu0 0
        %798 = vmatpush.bf16.msra.mxu0 0
        %799 = vmatpush.bf16.msra.mxu0 0
        %800 = vmatpush.bf16.msra.mxu0 %v792
        %801 = vmatpush.bf16.msra.mxu0 %v771
        %802 = vmatmul.bf16.gmra.mxu0 %v786
        %v803 = vpop.f32.mrf.mxu0
        %v804 = vadd.f32 0.0, %v803
        %v805 = vpop.f32.mrf.mxu0
        %v806 = vadd.f32 0.0, %v805
        %807 = vmatmul.bf16.gmra.mxu0 %v789
        %v808 = vpop.f32.mrf.mxu0
        %v809 = vadd.f32 0.0, %v808
        %v810 = vpop.f32.mrf.mxu0
        %811 = vdwg.mxu0
        %s812 = scalar_lea.vmem %s4, 12
        %v813 = vld [vmem:[%s812] sm:$0xf]
        %v814 = vld [vmem:[%s812 + $0x4] sm:$0xf]
        %v815 = vld [vmem:[%s812 + $0x8] sm:$0x3]
        %v819 = vunpack.c.l.b16 %v813
        %v820 = vunpack.c.l.b16 %v814
        %v821 = vunpack.c.l.b16 %v815
        %v822 = vpack.c.b16 %v820, %v819
        %v823 = vpack.c.b16 %v821, %v821
        %v825 = vsel %vm784, %v822, 0
        %v828 = vsel %vm784, %v823, 0
        %830 = vmatpush.bf16.msra.mxu0 0
        %831 = vmatpush.bf16.msra.mxu0 0
        %832 = vmatpush.bf16.msra.mxu0 0
        %833 = vmatpush.bf16.msra.mxu0 0
        %834 = vmatpush.bf16.msra.mxu0 0
        %835 = vmatpush.bf16.msra.mxu0 0
        %836 = vmatpush.bf16.msra.mxu0 %v792
        %837 = vmatpush.bf16.msra.mxu0 %v771
        %838 = vmatmul.bf16.gmra.mxu0 %v825
        %v839 = vpop.f32.mrf.mxu0
        %v840 = vadd.f32 0.0, %v839
        %v841 = vpop.f32.mrf.mxu0
        %v842 = vadd.f32 0.0, %v841
        %843 = vmatmul.bf16.gmra.mxu0 %v828
        %v844 = vpop.f32.mrf.mxu0
        %v845 = vadd.f32 0.0, %v844
        %v846 = vpop.f32.mrf.mxu0
        %847 = vdwg.mxu0
        %v848 = vmul.f32 %v804, %v804
        %v849 = vmul.f32 %v806, %v806
        %v850 = vmul.f32 %v809, %v809
        %v851 = vmul.f32 %v840, %v840
        %v852 = vmul.f32 %v842, %v842
        %v853 = vmul.f32 %v845, %v845
        %v854 = vadd.f32 %v848, %v851
        %v855 = vadd.f32 %v849, %v852
        %v856 = vadd.f32 %v850, %v853
        %v857 = vrsqrt.pop %v854
        %v858 = vmul.f32 %v857, %v854
        %v859 = vmul.f32 %v858, %v857
        %v860 = vmul.f32 0.5, %v859
        %v861 = vsub.f32 1.5, %v860
        %v862 = vmul.f32 %v857, %v861
        %v863 = vmul.f32 %v854, %v862
        %vm864 = vcmp.eq.f32.partialorder %v854, inf
        %v865 = vsel %vm864, %v854, %v863
        %vm866 = vcmp.eq.f32.partialorder %v854, 0.0
        %v867 = vand.u32 %v854, 2147483648
        %v868 = vsel %vm866, %v867, %v865
        %v869 = vrsqrt.pop %v855
        %v870 = vmul.f32 %v869, %v855
        %v871 = vmul.f32 %v870, %v869
        %v872 = vmul.f32 0.5, %v871
        %v873 = vsub.f32 1.5, %v872
        %v874 = vmul.f32 %v869, %v873
        %v875 = vmul.f32 %v855, %v874
        %vm876 = vcmp.eq.f32.partialorder %v855, inf
        %v877 = vsel %vm876, %v855, %v875
        %vm878 = vcmp.eq.f32.partialorder %v855, 0.0
        %v879 = vand.u32 %v855, 2147483648
        %v880 = vsel %vm878, %v879, %v877
        %v881 = vrsqrt.pop %v856
        %v882 = vmul.f32 %v881, %v856
        %v883 = vmul.f32 %v882, %v881
        %v884 = vmul.f32 0.5, %v883
        %v885 = vsub.f32 1.5, %v884
        %v886 = vmul.f32 %v881, %v885
        %v887 = vmul.f32 %v856, %v886
        %vm888 = vcmp.eq.f32.partialorder %v856, inf
        %v889 = vsel %vm888, %v856, %v887
        %vm890 = vcmp.eq.f32.partialorder %v856, 0.0
        %v891 = vand.u32 %v856, 2147483648
        %v892 = vsel %vm890, %v891, %v889
        %v893 = vpack.c.bf16 %v880, %v868
        %v894 = vpack.c.bf16 %v892, %v892
        %v895 = vld [vmem:[%s5] sm:$0xf]
        %v896 = vld [vmem:[%s5 + $0x4] sm:$0xf]
        %v897 = vld [vmem:[%s5 + $0x8] sm:$0xf]
        %v898 = vld [vmem:[%s5 + $0xc] sm:$0xf]
        %v903 = vunpack.c.l.b16 %v895
        %v904 = vunpack.c.l.b16 %v896
        %v905 = vunpack.c.l.b16 %v897
        %v906 = vunpack.c.l.b16 %v898
        %v907 = vpack.c.b16 %v904, %v903
        %v908 = vpack.c.b16 %v906, %v905
        %v912 = vsel %vm297, %v893, 0
        %v915 = vsel %vm297, %v894, 0
        %917 = vmatpush.bf16.msra.mxu0 0
        %918 = vmatpush.bf16.msra.mxu0 0
        %919 = vmatpush.bf16.msra.mxu0 0
        %920 = vmatpush.bf16.msra.mxu0 0
        %921 = vmatpush.bf16.msra.mxu0 0
        %922 = vmatpush.bf16.msra.mxu0 0
        %923 = vmatpush.bf16.msra.mxu0 %v908
        %924 = vmatpush.bf16.msra.mxu0 %v907
        %925 = vmatmul.bf16.gmra.mxu0 %v912
        %v926 = vpop.f32.mrf.mxu0
        %v927 = vadd.f32 0.0, %v926
        %v928 = vpop.f32.mrf.mxu0
        %v929 = vadd.f32 0.0, %v928
        %930 = vmatmul.bf16.gmra.mxu0 %v915
        %v931 = vpop.f32.mrf.mxu0
        %v932 = vadd.f32 0.0, %v931
        %v933 = vpop.f32.mrf.mxu0
        %934 = vdwg.mxu0
        %v935 = vpack.c.bf16 %v927, %v927
        %v936 = vpack.c.bf16 %v929, %v929
        %v937 = vpack.c.bf16 %v932, %v932
        %938 = vst [vmem:[%s268] sm:$0xf] %v935
        %939 = vst [vmem:[%s268 + $0x4] sm:$0xf] %v936
        %940 = vst [vmem:[%s268 + $0x8] sm:$0x3] %v937
        %p941 = scmp.lt.s32.totalorder %s18, 1
        %s942 = scalar_select %p941, %s18, 1
        %s943 = smul.addr %s942, 3
        %s944 = smul.addr %s943, 4
        %s945 = scalar_lea.vmem %s6, %s944
        // Predicated region
        $region49: #{tpu_custom_call.1} parent=43 // pred_check
          %p946 = pneg %p167
        $region50: #{tpu_custom_call.1} parent=43 // pred_check_branch
          %948 = sbr.rel (%p946) target = $region52
        $region51: #{tpu_custom_call.1} parent=43 // pred_region
          _
        $region52: #{tpu_custom_call.1} parent=43 // pred_fallthru
          _
      $region44: #{tpu_custom_call.1} parent=5 // pred_fallthru
        _
      %p949 = scmp.le.s32.totalorder 2, %s13
      // Predicated region
      $region53: #{tpu_custom_call.1} parent=5 // pred_check
        %p950 = pneg %p949
      $region54: #{tpu_custom_call.1} parent=5 // pred_check_branch
        %952 = sbr.rel (%p950) target = $region56
      $region55: #{tpu_custom_call.1} parent=5 // pred_region
        %s953 = ssub.s32 %s13, 2
        // Predicated region
        $region57: #{tpu_custom_call.1} parent=55 // pred_check
          %p954 = pneg %p173
        $region58: #{tpu_custom_call.1} parent=55 // pred_check_branch
          %956 = sbr.rel (%p954) target = $region60
        $region59: #{tpu_custom_call.1} parent=55 // pred_region
          %p957 = scmp.lt.s32.totalorder %s19, 1
          %s958 = scalar_select %p957, %s19, 1
          %s959 = smul.addr %s958, 3
          %s960 = smul.addr %s959, 4
          %s961 = scalar_lea.vmem %s6, %s960
        $region60: #{tpu_custom_call.1} parent=55 // pred_fallthru
          _
      $region56: #{tpu_custom_call.1} parent=5 // pred_fallthru
        _
    $region6: #{tpu_custom_call.1} parent=1 // loop_footer
      %s17 = sadd.s32 1, %s13
    $region7: #{tpu_custom_call.1} parent=1 // loop_footer_branch
      %12 = sbr.rel target = $region3
    $region8: #{tpu_custom_call.1} parent=1 // loop_exit
      _
    %962 = vsyncpa [#allocation3], 1
    %s963 = scalar_lea.sflag [#allocation3], 1
    %964 = vsyncpa %s963, 1

</llo_original>
